<compile_context>
chip_gen: v7x
topology: tpu7x:2x2x1
jax: 0.10.0
libtpu: 0.0.40
codegen_flags: <defaults>
</compile_context>

<pallas_src>
import functools

import jax
import jax.numpy as jnp
from jax.experimental import pallas as pl
from jax.experimental.pallas import tpu as pltpu

_LANE = 128
_BLOCK_ROWS = 4096            # 4096x128 f32 = 2 MiB per input per grid step
_SINGLE_BLOCK_MAX_ROWS = 4096  # up to here, whole problem in one block
_NUM_SPLITS = 2                # leading "parallel" grid axis (both TCs on v7x)
_SMOOTH = 1e-06
_VMEM_LIMIT = 32 * 1024 * 1024


def _dice_single_kernel(pred_ref, target_ref, out_ref):
    """Whole problem in one block: compute sums + final expression directly."""
    p = pred_ref[...].astype(jnp.float32)
    t = target_ref[...].astype(jnp.float32)
    intersection = jnp.sum(p * t)
    total = jnp.sum(p + t)            # == sum(p) + sum(t)
    smooth = jnp.float32(_SMOOTH)
    out_ref[0] = 1.0 - (2.0 * intersection + smooth) / (total + smooth)


def _partial_sums_kernel(pred_ref, target_ref, out_ref):
    """One small block -> (intersection, total) partial sums (for the tail)."""
    p = pred_ref[...].astype(jnp.float32)
    t = target_ref[...].astype(jnp.float32)
    out_ref[0] = jnp.sum(p * t)
    out_ref[1] = jnp.sum(p + t)


def _dice_tiled_kernel(pred_ref, target_ref, out_ref, acc_pt_ref, acc_s_ref,
                       *, steps_per_split, total_chunks):
    """Large inputs: vreg-sized VMEM accumulators, per-split partial outputs."""
    i = pl.program_id(0)   # split index (parallel axis)
    k = pl.program_id(1)   # step within split (reduction axis)

    @pl.when(k == 0)
    def _():
        acc_pt_ref[...] = jnp.zeros_like(acc_pt_ref)
        acc_s_ref[...] = jnp.zeros_like(acc_s_ref)

    chunk = i * steps_per_split + k

    # Overshoot steps (only when total_chunks is odd) are clamped to a valid
    # block by the index_map; skip their contribution here.
    @pl.when(chunk < total_chunks)
    def _():
        p = pred_ref[...].astype(jnp.float32)
        t = target_ref[...].astype(jnp.float32)
        # Fold the (BLOCK_ROWS,128) tile into a (8,128) vreg-sized partial with
        # pure VALU adds; scalar cross-lane reduction happens once per split.
        acc_pt_ref[...] += jnp.sum((p * t).reshape(-1, 8, _LANE), axis=0)
        acc_s_ref[...] += jnp.sum((p + t).reshape(-1, 8, _LANE), axis=0)

    @pl.when(k == pl.num_programs(1) - 1)
    def _():
        inter = jnp.sum(acc_pt_ref[...])
        tot = jnp.sum(acc_s_ref[...])
        lane = jax.lax.broadcasted_iota(jnp.int32, (1, _LANE), 1)
        out_ref[...] = jnp.where(lane == 0, inter,
                                 jnp.where(lane == 1, tot, 0.0))


def dice_loss(pred, target):
    """Pallas equivalent of DiceLoss.forward(pred, target). Returns a scalar."""
    p = pred.reshape(-1)
    t = target.reshape(-1)
    n = p.shape[0]

    rows = pl.cdiv(n, _LANE)
    lane_pad = rows * _LANE - n
    if lane_pad:
        # Only hit when the flattened length is not a multiple of 128 (rare for
        # NCHW segmentation shapes). Zero pad is sum-neutral.
        # TODO(synk): handle the <128-element remainder separately to avoid the
        # copy for huge non-lane-aligned inputs.
        p = jnp.pad(p, (0, lane_pad))
        t = jnp.pad(t, (0, lane_pad))

    p2 = p.reshape(rows, _LANE)
    t2 = t.reshape(rows, _LANE)
    smooth = jnp.float32(_SMOOTH)

    if rows <= _SINGLE_BLOCK_MAX_ROWS:
        # Single-shot: one grid step, no accumulator machinery, loss in-kernel.
        out = pl.pallas_call(
            _dice_single_kernel,
            out_shape=jax.ShapeDtypeStruct((1,), jnp.float32),
            grid=(1,),
            in_specs=[
                pl.BlockSpec((rows, _LANE), lambda i: (0, 0)),
                pl.BlockSpec((rows, _LANE), lambda i: (0, 0)),
            ],
            out_specs=pl.BlockSpec(memory_space=pltpu.SMEM),
            compiler_params=pltpu.CompilerParams(vmem_limit_bytes=_VMEM_LIMIT),
        )(p2, t2)
        return out[0]

    # ---- tiled path: full 4096-row blocks only (no partial windows) ----
    total_chunks = rows // _BLOCK_ROWS          # >= 1 here (rows > 4096)
    main_rows = total_chunks * _BLOCK_ROWS
    tail_rows = rows - main_rows                # 0 <= tail_rows < _BLOCK_ROWS
    steps_per_split = pl.cdiv(total_chunks, _NUM_SPLITS)

    def in_map(i, k):
        # Clamp overshoot steps to an in-bounds block; kernel masks them out.
        return (jnp.minimum(i * steps_per_split + k, total_chunks - 1), 0)

    kernel = functools.partial(
        _dice_tiled_kernel,
        steps_per_split=steps_per_split,
        total_chunks=total_chunks,
    )

    partials = pl.pallas_call(
        kernel,
        out_shape=jax.ShapeDtypeStruct((_NUM_SPLITS, _LANE), jnp.float32),
        grid=(_NUM_SPLITS, steps_per_split),
        in_specs=[
            pl.BlockSpec((_BLOCK_ROWS, _LANE), in_map),
            pl.BlockSpec((_BLOCK_ROWS, _LANE), in_map),
        ],
        out_specs=pl.BlockSpec((1, _LANE), lambda i, k: (i, 0)),
        scratch_shapes=[
            pltpu.VMEM((8, _LANE), jnp.float32),
            pltpu.VMEM((8, _LANE), jnp.float32),
        ],
        compiler_params=pltpu.CompilerParams(
            dimension_semantics=("parallel", "arbitrary"),
            vmem_limit_bytes=_VMEM_LIMIT),
    )(p2, t2)

    intersection = jnp.sum(partials[:, 0])
    total = jnp.sum(partials[:, 1])

    if tail_rows:
        tail = pl.pallas_call(
            _partial_sums_kernel,
            out_shape=jax.ShapeDtypeStruct((2,), jnp.float32),
            grid=(1,),
            in_specs=[
                pl.BlockSpec((tail_rows, _LANE), lambda i: (0, 0)),
                pl.BlockSpec((tail_rows, _LANE), lambda i: (0, 0)),
            ],
            out_specs=pl.BlockSpec(memory_space=pltpu.SMEM),
            compiler_params=pltpu.CompilerParams(vmem_limit_bytes=_VMEM_LIMIT),
        )(p2[main_rows:], t2[main_rows:])
        intersection = intersection + tail[0]
        total = total + tail[1]

    dice = (2.0 * intersection + smooth) / (total + smooth)
    return 1.0 - dice


def _dice_ref(pred, target):
    smooth = _SMOOTH
    pf = pred.reshape(-1).astype(jnp.float32)
    tf = target.reshape(-1).astype(jnp.float32)
    inter = jnp.sum(pf * tf)
    return 1.0 - (2.0 * inter + smooth) / (jnp.sum(pf) + jnp.sum(tf) + smooth)


def _check(pred, target, rtol=5e-5, atol=1e-6):
    loss = jax.block_until_ready(dice_loss(pred, target))
    ref = _dice_ref(pred, target)
    assert jnp.allclose(loss, ref, rtol=rtol, atol=atol), (loss, ref)


if __name__ == "__main__":
    key = jax.random.PRNGKey(0)
    keys = jax.random.split(key, 8)

    # 1) Primary small case (NCHW UNet output / mask): single-block path.
    pred = jax.nn.sigmoid(jax.random.normal(keys[0], (2, 4, 16, 16), jnp.float32))
    target = (jax.random.uniform(keys[1], (2, 4, 16, 16)) > 0.5).astype(jnp.float32)
    _check(pred, target)

    # 2) Medium case (1024 rows): now also single-shot (raised threshold).
    pred_m = jax.nn.sigmoid(jax.random.normal(keys[2], (2, 4, 128, 128), jnp.float32))
    target_m = (jax.random.uniform(keys[3], (2, 4, 128, 128)) > 0.5).astype(jnp.float32)
    _check(pred_m, target_m)

    # 3) Tiled path, block-aligned (8192 rows, even split, no tail).
    pred_l = jax.nn.sigmoid(jax.random.normal(keys[4], (2, 8, 256, 256), jnp.float32))
    target_l = (jax.random.uniform(keys[5], (2, 8, 256, 256)) > 0.5).astype(jnp.float32)
    _check(pred_l, target_l)

    # 4) Tiled path with odd chunk count + tail remainder (6144 rows).
    pred_t = jax.nn.sigmoid(jax.random.normal(keys[6], (3, 4, 256, 256), jnp.float32))
    target_t = (jax.random.uniform(keys[7], (3, 4, 256, 256)) > 0.5).astype(jnp.float32)
    _check(pred_t, target_t)

    print("KERNEL_OK")
</pallas_src>

<mosaic_0001>
module attributes {stable_mosaic.version = 11 : i64} {
  func.func @_dice_single_kernel(%arg0: i32, %arg1: memref<16x128xf32, #tpu.memory_space<vmem>>, %arg2: memref<16x128xf32, #tpu.memory_space<vmem>>, %arg3: memref<1xf32, #tpu.memory_space<smem>>) attributes {dimension_semantics = [#tpu.dimension_semantics<arbitrary>], iteration_bounds = array<i64: 1>, scalar_prefetch = 0 : i64, scratch_operands = 0 : i64, tpu.core_type = #tpu.core_type<tc>, window_params = [{pipeline_mode = #tpu.pipeline_mode<synchronous>, transform_indices = @transform_0, window_bounds = array<i64: 16, 128>}, {pipeline_mode = #tpu.pipeline_mode<synchronous>, transform_indices = @transform_1, window_bounds = array<i64: 16, 128>}, {transform_indices = @transform_2, window_bounds = array<i64: 1>}]} {
    %c0 = arith.constant 0 : index
    %c0_0 = arith.constant 0 : index
    %0 = vector.load %arg1[%c0, %c0_0] : memref<16x128xf32, #tpu.memory_space<vmem>>, vector<16x128xf32>
    %c0_1 = arith.constant 0 : index
    %c0_2 = arith.constant 0 : index
    %1 = vector.load %arg2[%c0_1, %c0_2] : memref<16x128xf32, #tpu.memory_space<vmem>>, vector<16x128xf32>
    %2 = arith.mulf %0, %1 : vector<16x128xf32>
    %3 = vector.shape_cast %2 : vector<16x128xf32> to vector<1x16x128xf32>
    %cst = arith.constant dense<0.000000e+00> : vector<1xf32>
    %4 = vector.multi_reduction <add>, %3, %cst [1, 2] : vector<1x16x128xf32> to vector<1xf32>
    %5 = vector.shape_cast %4 : vector<1xf32> to vector<1x1x1xf32>
    %6 = vector.extract %5[0, 0, 0] : f32 from vector<1x1x1xf32>
    %7 = arith.addf %0, %1 : vector<16x128xf32>
    %8 = vector.shape_cast %7 : vector<16x128xf32> to vector<1x16x128xf32>
    %cst_3 = arith.constant dense<0.000000e+00> : vector<1xf32>
    %9 = vector.multi_reduction <add>, %8, %cst_3 [1, 2] : vector<1x16x128xf32> to vector<1xf32>
    %10 = vector.shape_cast %9 : vector<1xf32> to vector<1x1x1xf32>
    %11 = vector.extract %10[0, 0, 0] : f32 from vector<1x1x1xf32>
    %cst_4 = arith.constant 2.000000e+00 : f32
    %12 = arith.mulf %cst_4, %6 : f32
    %cst_5 = arith.constant 9.99999997E-7 : f32
    %13 = arith.addf %12, %cst_5 : f32
    %cst_6 = arith.constant 9.99999997E-7 : f32
    %14 = arith.addf %11, %cst_6 : f32
    %15 = arith.divf %13, %14 : f32
    %cst_7 = arith.constant 1.000000e+00 : f32
    %16 = arith.subf %cst_7, %15 : f32
    %c0_8 = arith.constant 0 : index
    %17 = memref.load %arg3[%c0_8] : memref<1xf32, #tpu.memory_space<smem>>
    memref.store %16, %arg3[%c0_8] : memref<1xf32, #tpu.memory_space<smem>>
    return
  }
  func.func @transform_0(%arg0: i32) -> (i32, i32) {
    %c0_i32 = arith.constant 0 : i32
    %c0_i32_0 = arith.constant 0 : i32
    %c0_i32_1 = arith.constant 0 : i32
    return %c0_i32, %c0_i32_0 : i32, i32
  }
  func.func @transform_1(%arg0: i32) -> (i32, i32) {
    %c0_i32 = arith.constant 0 : i32
    %c0_i32_0 = arith.constant 0 : i32
    %c0_i32_1 = arith.constant 0 : i32
    return %c0_i32, %c0_i32_0 : i32, i32
  }
  func.func @transform_2(%arg0: i32) -> i32 {
    %c0_i32 = arith.constant 0 : i32
    %c0_i32_0 = arith.constant 0 : i32
    return %c0_i32 : i32
  }
}

</mosaic_0001>

<llo_original>
// kernel: tpu_custom_call.1
$region0: #{tpu_custom_call.1}
  #allocation0 [shape = 'u32[]', space=smem, size = 0x4, offset = 0x4, fixed_abs, tag = 'smem constant byte address 0x4 - core index']
  #allocation1 [shape = 'u32[144,128]{1,0:T(1,128)}', space=vmem, size = 0x12000, scoped, tag = 'internal scratch']
  %s0 = inlined_call_operand.hbm [shape: f32[16,128], index: 0, kind: input, shape index: {}]
  %s1 = inlined_call_operand.hbm [shape: f32[16,128], index: 1, kind: input, shape index: {}]
  %s2 = inlined_call_operand.hbm [shape: f32[1], index: 2, kind: output, shape index: {}]
  %s3 = sld [smem:[#allocation0]]
  $region26: #{tpu_custom_call.1} parent=0
    _
  %s5 = ssub.s32 1, %s3
  %s6 = scalar_select 0, %s5, %s3
  $region1: #{tpu_custom_call.1} parent=0
    #allocation2 [shape = 'u8[8192]{0}', space=vmem, size = 0x2000, scoped, tag = 'input window, operand 0, single buffered']
    #allocation3 [shape = 's32[1]{0}', space=sflag, size = 0x4, scoped, tag = 'scoped memory for tpu_custom_call.1']
    #allocation4 [shape = 's32[1]{0}', space=sflag, size = 0x4, scoped, tag = 'scoped memory for tpu_custom_call.1']
    #allocation5 [shape = 'u8[8192]{0}', space=vmem, size = 0x2000, scoped, tag = 'input window, operand 1, single buffered']
    #allocation6 [shape = 's32[1]{0}', space=sflag, size = 0x4, scoped, tag = 'scoped memory for tpu_custom_call.1']
    #allocation7 [shape = 'u8[512]{0}', space=smem, size = 0x200, scoped, tag = 'output window, operand 0, single buffered']
    %7 = vsyncpa [#allocation3], 0
    %8 = vsyncpa [#allocation6], 0
    %9 = vsyncpa [#allocation4], 0
    // Predicated region
    $region2: #{tpu_custom_call.1} parent=1 // pred_check
      _
    $region3: #{tpu_custom_call.1} parent=1 // pred_check_branch
      %11 = sbr.rel (0) target = $region5
    $region4: #{tpu_custom_call.1} parent=1 // pred_region
      %s13 = ssub.s32 256, 256
      %14 = vsyncadd [#allocation3], %s13
      %s15 = sshll.u32 [#allocation2], 4
      %s16 = int_to_ptr.vmem [resolvable:$true] %s15
      %21 = dma.hbm_to_vmem [thread:$0]  %s0, 256, %s16, [#allocation3], 128, 128, 8
    $region5: #{tpu_custom_call.1} parent=1 // pred_fallthru
      _
    // Predicated region
    $region6: #{tpu_custom_call.1} parent=1 // pred_check
      _
    $region7: #{tpu_custom_call.1} parent=1 // pred_check_branch
      %23 = sbr.rel (0) target = $region9
    $region8: #{tpu_custom_call.1} parent=1 // pred_region
      %s25 = ssub.s32 256, 256
      %26 = vsyncadd [#allocation6], %s25
      %s27 = sshll.u32 [#allocation5], 4
      %s28 = int_to_ptr.vmem [resolvable:$true] %s27
      %33 = dma.hbm_to_vmem [thread:$0]  %s1, 256, %s28, [#allocation6], 128, 128, 8
    $region9: #{tpu_custom_call.1} parent=1 // pred_fallthru
      _
    // Predicated region
    $region10: #{tpu_custom_call.1} parent=1 // pred_check
      _
    $region11: #{tpu_custom_call.1} parent=1 // pred_check_branch
      %35 = sbr.rel (0) target = $region13
    $region12: #{tpu_custom_call.1} parent=1 // pred_region
      %36 = dma.done [#allocation3], 256
    $region13: #{tpu_custom_call.1} parent=1 // pred_fallthru
      _
    // Predicated region
    $region14: #{tpu_custom_call.1} parent=1 // pred_check
      _
    $region15: #{tpu_custom_call.1} parent=1 // pred_check_branch
      %38 = sbr.rel (0) target = $region17
    $region16: #{tpu_custom_call.1} parent=1 // pred_region
      %39 = dma.done [#allocation6], 256
    $region17: #{tpu_custom_call.1} parent=1 // pred_fallthru
      _
    %v40 = vld [vmem:[#allocation2] sm:$0xff]
    %v41 = vld [vmem:[#allocation2 + $0x8] sm:$0xff]
    %v42 = vld [vmem:[#allocation5] sm:$0xff]
    %v43 = vld [vmem:[#allocation5 + $0x8] sm:$0xff]
    %v44 = vmul.f32 %v40, %v42
    %v45 = vmul.f32 %v41, %v43
    %v46 = vadd.f32 %v44, %v45
    %47 = vadd.xlane.f32.xlu0 %v46
    %v48 = vpop.xlane.xlu0 %47
    %v49 = vrot.slane %v48, 4
    %v50 = vadd.f32 %v48, %v49
    %v51 = vrot.slane %v50, 2
    %v52 = vadd.f32 %v50, %v51
    %v53 = vrot.slane %v52, 1
    %v54 = vadd.f32 %v52, %v53
    %s55 = vtos %v54
    %v56 = vadd.f32 %v40, %v42
    %v57 = vadd.f32 %v41, %v43
    %v58 = vadd.f32 %v56, %v57
    %59 = vadd.xlane.f32.xlu0 %v58
    %v60 = vpop.xlane.xlu0 %59
    %v61 = vrot.slane %v60, 4
    %v62 = vadd.f32 %v60, %v61
    %v63 = vrot.slane %v62, 2
    %v64 = vadd.f32 %v62, %v63
    %v65 = vrot.slane %v64, 1
    %v66 = vadd.f32 %v64, %v65
    %s67 = vtos %v66
    %s68 = smul.f32 %s55, 2.0
    %s69 = sadd.f32 %s68, 1e-06
    %s70 = sadd.f32 %s67, 1e-06
    %v71 = vstv %s70
    %v72 = vrcp.pop %v71
    %s73 = vtos %v72
    %s74 = smul.f32 %s69, %s73
    %s75 = ssub.f32 1.0, %s74
    %s76 = scalar_lea.smem [#allocation7], 0
    %77 = sst [smem:[%s76]] %s75
    // Predicated region
    $region18: #{tpu_custom_call.1} parent=1 // pred_check
      _
    $region19: #{tpu_custom_call.1} parent=1 // pred_check_branch
      %79 = sbr.rel (0) target = $region21
    $region20: #{tpu_custom_call.1} parent=1 // pred_region
      %s81 = ssub.s32 16, 16
      %82 = vsyncadd [#allocation4], %s81
      %85 = dma.smem_to_hbm [#allocation7], 16, %s2, [#allocation4]
    $region21: #{tpu_custom_call.1} parent=1 // pred_fallthru
      _
    // Predicated region
    $region22: #{tpu_custom_call.1} parent=1 // pred_check
      _
    $region23: #{tpu_custom_call.1} parent=1 // pred_check_branch
      %87 = sbr.rel (0) target = $region25
    $region24: #{tpu_custom_call.1} parent=1 // pred_region
      %88 = dma.done [#allocation4], 16
    $region25: #{tpu_custom_call.1} parent=1 // pred_fallthru
      _
    %89 = sfence
    %90 = vsyncpa [#allocation3], 1
    %91 = vsyncpa [#allocation6], 1
    %92 = vsyncpa [#allocation4], 1

</llo_original>
